<compile_context>
chip_gen: v6e
topology: v6e:2x2x1
jax: 0.10.0
libtpu: 0.0.40
codegen_flags: <defaults>
</compile_context>

<pallas_src>
import math

import jax
import jax.numpy as jnp
from jax.experimental import pallas as pl
from jax.experimental.pallas import tpu as pltpu

_LANES = 128
_LOG2E = 1.4426950408889634


# -----------------------------------------------------------------------------
# Helpers.
# -----------------------------------------------------------------------------
def _vmem_limit_bytes(tile_bytes):
    """Generation-aware scoped-VMEM request (v7x: 64 MiB phys, v5e/v6e: 128 MiB)."""
    try:
        cap = int(pltpu.get_tpu_info().vmem_capacity_bytes)
    except Exception:
        cap = 64 * 1024 * 1024
    hi = (cap * 3) // 4                      # leave headroom for compiler scratch
    return int(min(hi, max(32 * 1024 * 1024, int(tile_bytes))))


def _pick_row_tile(n):
    for t in (512, 256, 128, 64, 32, 16, 8):
        if n % t == 0:
            return t
    return n


def _pick_col_tile(n):
    if n <= 2048:
        return n
    for t in (512, 256, 128):
        if n % t == 0:
            return t
    return n


def _pick_seq_tile(t_len, prefer):
    for t in prefer:
        if t <= t_len and t_len % t == 0:
            return t
    return t_len


def _lane_bcast(rep, n):
    """rep: (rows, 128) lane-replicated -> (rows, n), still replicated."""
    rows, lanes = rep.shape
    if n == lanes:
        return rep
    if n < lanes:
        return rep[:, :n]
    if n % lanes == 0:
        return jnp.tile(rep, (1, n // lanes))
    return jnp.broadcast_to(rep[:, :1], (rows, n))


# -----------------------------------------------------------------------------
# Kernel 1: generic row/col-tiled GEMM + bias (projections and W_O epilogue).
# -----------------------------------------------------------------------------
def _gemm_bias_kernel(x_ref, w_ref, b_ref, o_ref):
    acc = jnp.dot(x_ref[...], w_ref[...], preferred_element_type=jnp.float32)
    o_ref[...] = (acc + b_ref[...]).astype(o_ref.dtype)


def _gemm_bias(x, w, b, out_dtype):
    """(R, K) @ (K, N) + b(1, N) -> (R, N), lane-dense, f32 accumulation."""
    R, Kd = x.shape
    N = w.shape[1]
    tm = _pick_row_tile(R)
    tn = _pick_col_tile(N)
    grid = (R // tm, N // tn)

    tile_bytes = 2 * (tm * Kd * x.dtype.itemsize
                      + Kd * tn * w.dtype.itemsize
                      + tn * 4
                      + tm * tn * jnp.dtype(out_dtype).itemsize)

    grid_spec = pltpu.PrefetchScalarGridSpec(
        num_scalar_prefetch=0,
        grid=grid,
        in_specs=[pl.BlockSpec((tm, Kd), lambda r, n: (r, 0)),
                  pl.BlockSpec((Kd, tn), lambda r, n: (0, n)),
                  pl.BlockSpec((1, tn), lambda r, n: (0, n))],
        out_specs=pl.BlockSpec((tm, tn), lambda r, n: (r, n)),
    )
    return pl.pallas_call(
        _gemm_bias_kernel,
        out_shape=jax.ShapeDtypeStruct((R, N), out_dtype),
        grid_spec=grid_spec,
        compiler_params=pltpu.CompilerParams(
            dimension_semantics=("parallel", "parallel"),
            vmem_limit_bytes=_vmem_limit_bytes(2 * tile_bytes),
        ),
    )(x, w, b)


# -----------------------------------------------------------------------------
# Kernel 2: flash attention over 2-D (B*T, h*d) projections, heads in-kernel.
# -----------------------------------------------------------------------------
def _flash_mha(pq2d, pk2d, pv2d, *, B, T, h, dk, dv, tq, tk,
               out_dtype=jnp.bfloat16):
    hdk = h * dk
    hdv = h * dv
    nq = T // tq
    nkv = T // tk

    def kernel(q_ref, k_ref, v_ref, o_ref, m_sc, l_sc, acc_sc):
        i = pl.program_id(1)
        j = pl.program_id(2)
        nj = pl.num_programs(2)

        @pl.when(j == 0)
        def _init():
            m_sc[...] = jnp.full((h, tq, _LANES), -1e30, jnp.float32)
            l_sc[...] = jnp.zeros((h, tq, _LANES), jnp.float32)
            acc_sc[...] = jnp.zeros((tq, hdv), jnp.float32)

        q_lo = i * tq
        q_hi = i * tq + tq - 1
        k_lo = j * tk
        k_hi = j * tk + tk - 1
        visible = k_lo <= q_hi        # tile intersects the causal triangle
        full = k_hi <= q_lo           # strictly below the diagonal -> no mask

        def update(masked):
            q = q_ref[...]            # (tq, h*dk) bf16, log2e/sqrt(dk) pre-folded
            k = k_ref[...]            # (tk, h*dk) bf16
            v = v_ref[...]            # (tk, h*dv) bf16
            if masked:
                row = q_lo + jax.lax.broadcasted_iota(jnp.int32, (tq, tk), 0)
                col = k_lo + jax.lax.broadcasted_iota(jnp.int32, (tq, tk), 1)
                keep = col <= row
            for hh in range(h):
                q_h = q[:, hh * dk:(hh + 1) * dk]
                k_h = k[:, hh * dk:(hh + 1) * dk]
                v_h = v[:, hh * dv:(hh + 1) * dv]
                # log2-domain scores (scale folded into Wq/bq).
                s = jax.lax.dot_general(
                    q_h, k_h, (((1,), (1,)), ((), ())),
                    preferred_element_type=jnp.float32)           # (tq, tk)
                if masked:
                    s = jnp.where(keep, s, -1e30)   # finite mask: padded-tile safe
                m_prev = m_sc[hh]                                  # (tq, 128)
                m_new = jnp.maximum(m_prev,
                                    jnp.max(s, axis=-1, keepdims=True))
                alpha = jnp.exp2(m_prev - m_new)                   # (tq, 128)
                p = jnp.exp2(s - _lane_bcast(m_new, tk))           # (tq, tk)
                l_sc[hh] = alpha * l_sc[hh] + jnp.sum(p, axis=-1, keepdims=True)
                cols = slice(hh * dv, (hh + 1) * dv)
                acc_sc[:, cols] = (_lane_bcast(alpha, dv) * acc_sc[:, cols]
                                   + jnp.dot(p.astype(v_h.dtype), v_h,
                                             preferred_element_type=jnp.float32))
                m_sc[hh] = m_new

        @pl.when(full)
        def _fast():                       # unmasked fast path: no iota / where
            update(masked=False)

        @pl.when(jnp.logical_and(visible, jnp.logical_not(full)))
        def _diag():                       # diagonal-straddling tiles only
            update(masked=True)

        @pl.when(j == nj - 1)
        def _finalize():
            for hh in range(h):
                inv_l = _lane_bcast(pl.reciprocal(l_sc[hh], approx=True), dv)
                cols = slice(hh * dv, (hh + 1) * dv)
                o_ref[:, cols] = (acc_sc[:, cols] * inv_l).astype(o_ref.dtype)

    def q_map(b, i, j):
        return (b * nq + i, 0)

    def kv_map(b, i, j):
        # Clamp to last causally-valid KV block: dead steps reuse the previous
        # block index, so their HBM fetch is skipped entirely.
        last_valid = (i * tq + tq - 1) // tk
        return (b * nkv + jnp.minimum(j, last_valid), 0)

    grid = (B, nq, nkv)
    grid_spec = pltpu.PrefetchScalarGridSpec(
        num_scalar_prefetch=0,
        grid=grid,
        in_specs=[pl.BlockSpec((tq, hdk), q_map),
                  pl.BlockSpec((tk, hdk), kv_map),
                  pl.BlockSpec((tk, hdv), kv_map)],
        out_specs=pl.BlockSpec((tq, hdv), q_map),
        scratch_shapes=[
            pltpu.VMEM((h, tq, _LANES), jnp.float32),   # running max (replicated)
            pltpu.VMEM((h, tq, _LANES), jnp.float32),   # running denom (replicated)
            pltpu.VMEM((tq, hdv), jnp.float32),         # per-head ctx accumulator
        ],
    )

    # ~half of the dense work thanks to causality.
    flops = int(B * h * T * T * (dk + dv))
    transcendentals = int(B * h * T * T // 2)
    bytes_accessed = int((pq2d.size + pk2d.size + pv2d.size) * 2 + B * T * hdv * 2)
    tile_bytes = (2 * (tq * hdk + 2 * tk * hdk + 2 * tk * hdv) * 2
                  + 2 * tq * hdv * 2
                  + 2 * h * tq * _LANES * 4 + tq * hdv * 4)

    return pl.pallas_call(
        kernel,
        out_shape=jax.ShapeDtypeStruct((B * T, hdv), out_dtype),
        grid_spec=grid_spec,
        compiler_params=pltpu.CompilerParams(
            dimension_semantics=("parallel", "parallel", "arbitrary"),
            vmem_limit_bytes=_vmem_limit_bytes(2 * tile_bytes),
        ),
        cost_estimate=pl.CostEstimate(flops=flops,
                                      transcendentals=transcendentals,
                                      bytes_accessed=bytes_accessed),
    )(pq2d, pk2d, pv2d)


# -----------------------------------------------------------------------------
# Public wrapper.
# -----------------------------------------------------------------------------
def multi_head_attention(Q, K, V, params_weights, *, tq=None, tk=None):
    Wq, bq, Wk, bk, Wv, bv, Wo = params_weights
    B, T, C = Q.shape
    h, _, dk = Wq.shape
    dv = Wv.shape[-1]

    if tq is None:
        tq = _pick_seq_tile(T, (128, 64, 32, 16, 8))
    if tk is None:
        tk = _pick_seq_tile(T, (256, 128, 64, 32, 16, 8))
    assert T % tq == 0 and T % tk == 0

    mxu = jnp.bfloat16
    # Fold softmax scale AND log2(e) (base-2 online softmax -> native exp2) into
    # the Q projection.  NOTE: folding before the bf16 cast changes rounding vs.
    # scaling f32 scores; fine at bf16 tolerances.
    scale = _LOG2E / math.sqrt(float(dk))
    Wq_cat = (jnp.transpose(Wq, (1, 0, 2)).reshape(C, h * dk) * scale).astype(mxu)
    bq_cat = (bq.reshape(1, h * dk) * scale).astype(jnp.float32)
    Wk_cat = jnp.transpose(Wk, (1, 0, 2)).reshape(C, h * dk).astype(mxu)
    bk_cat = bk.reshape(1, h * dk).astype(jnp.float32)
    Wv_cat = jnp.transpose(Wv, (1, 0, 2)).reshape(C, h * dv).astype(mxu)
    bv_cat = bv.reshape(1, h * dv).astype(jnp.float32)

    if Q is K and K is V:
        # Self-attention: one activation read, one wide lane-dense GEMM.
        X2d = Q.reshape(B * T, C).astype(mxu)
        W_all = jnp.concatenate([Wq_cat, Wk_cat, Wv_cat], axis=1)
        b_all = jnp.concatenate([bq_cat, bk_cat, bv_cat], axis=1)
        p_all = _gemm_bias(X2d, W_all, b_all, out_dtype=mxu)
        pq2d = p_all[:, :h * dk]
        pk2d = p_all[:, h * dk:2 * h * dk]
        pv2d = p_all[:, 2 * h * dk:]
    else:
        pq2d = _gemm_bias(Q.reshape(B * T, C).astype(mxu), Wq_cat, bq_cat, mxu)
        pk2d = _gemm_bias(K.reshape(B * T, C).astype(mxu), Wk_cat, bk_cat, mxu)
        pv2d = _gemm_bias(V.reshape(B * T, C).astype(mxu), Wv_cat, bv_cat, mxu)

    # Flash attention directly on the 2-D (B*T, h*d) layouts — no transposes.
    ctx2d = _flash_mha(pq2d, pk2d, pv2d, B=B, T=T, h=h, dk=dk, dv=dv,
                       tq=tq, tk=tk, out_dtype=mxu)

    # Batched W_O epilogue: (B*T, h*dv) @ (h*dv, C), contraction = h*dv.
    zero_b = jnp.zeros((1, C), jnp.float32)
    out2d = _gemm_bias(ctx2d, Wo.astype(mxu), zero_b, out_dtype=jnp.float32)
    # TODO(synk): training-mode dropout (pltpu.prng_*) — eval identity here.
    return out2d.reshape(B, T, C)


# -----------------------------------------------------------------------------
# Pure-JAX f32 reference (matches the PyTorch module's forward, eval mode).
# -----------------------------------------------------------------------------
def mha_reference(Q, K, V, params_weights):
    Wq, bq, Wk, bk, Wv, bv, Wo = params_weights
    dk = Wq.shape[-1]
    T = Q.shape[1]
    pQ = jnp.einsum('btc,hcd->bhtd', Q, Wq) + bq[None, :, None, :]
    pK = jnp.einsum('btc,hcd->bhtd', K, Wk) + bk[None, :, None, :]
    pV = jnp.einsum('btc,hcd->bhtd', V, Wv) + bv[None, :, None, :]
    s = jnp.einsum('bhtd,bhsd->bhts', pQ, pK) / math.sqrt(float(dk))
    mask = jnp.tril(jnp.ones((T, T), dtype=bool))[None, None]
    s = jnp.where(mask, s, -jnp.inf)
    w = jax.nn.softmax(s, axis=-1)
    ctx = jnp.einsum('bhts,bhsd->bhtd', w, pV)
    B, h, T_, dv = ctx.shape
    cat = jnp.transpose(ctx, (0, 2, 1, 3)).reshape(B, T_, h * dv)
    return jnp.einsum('bte,ec->btc', cat, Wo)


if __name__ == "__main__":
    # params: model_dim=32, dim_k=8, dim_v=8, h=4, context_length=16, dropout=0.1
    B, T, C = 2, 16, 32
    h, dk, dv = 4, 8, 8

    key = jax.random.PRNGKey(0)
    keys = jax.random.split(key, 12)
    wscale = 0.1
    Q = jax.random.normal(keys[0], (B, T, C), dtype=jnp.float32)
    K = jax.random.normal(keys[1], (B, T, C), dtype=jnp.float32)
    V = jax.random.normal(keys[2], (B, T, C), dtype=jnp.float32)

    Wq = wscale * jax.random.normal(keys[3], (h, C, dk), dtype=jnp.float32)
    bq = wscale * jax.random.normal(keys[4], (h, dk), dtype=jnp.float32)
    Wk = wscale * jax.random.normal(keys[5], (h, C, dk), dtype=jnp.float32)
    bk = wscale * jax.random.normal(keys[6], (h, dk), dtype=jnp.float32)
    Wv = wscale * jax.random.normal(keys[7], (h, C, dv), dtype=jnp.float32)
    bv = wscale * jax.random.normal(keys[8], (h, dv), dtype=jnp.float32)
    Wo = wscale * jax.random.normal(keys[9], (h * dv, C), dtype=jnp.float32)

    weights = (Wq, bq, Wk, bk, Wv, bv, Wo)

    # Multi-tile run (tq=tk=8): exercises the unmasked fast path, the masked
    # diagonal path, and the clamped/skipped fully-masked KV tiles.
    out = multi_head_attention(Q, K, V, weights, tq=8, tk=8)
    out = jax.block_until_ready(out)
    ref = mha_reference(Q, K, V, weights)
    assert out.shape == (B, T, C)
    assert bool(jnp.all(jnp.isfinite(out)))
    # bf16 MXU feeds / bf16 ctx writeback vs full-f32 reference -> loose tol.
    assert bool(jnp.allclose(out, ref, atol=5e-2, rtol=5e-2))

    # Self-attention (Q is K is V): exercises the fused single-X QKV projection.
    out_self = jax.block_until_ready(multi_head_attention(Q, Q, Q, weights))
    ref_self = mha_reference(Q, Q, Q, weights)
    assert bool(jnp.allclose(out_self, ref_self, atol=5e-2, rtol=5e-2))

    print("KERNEL_OK")
</pallas_src>

<mosaic_0001>
module attributes {stable_mosaic.version = 11 : i64} {
  func.func @_gemm_bias_kernel(%arg0: i32, %arg1: i32, %arg2: memref<32x32xbf16, #tpu.memory_space<vmem>>, %arg3: memref<32x32xbf16, #tpu.memory_space<vmem>>, %arg4: memref<1x32xf32, #tpu.memory_space<vmem>>, %arg5: memref<32x32xbf16, #tpu.memory_space<vmem>>) attributes {dimension_semantics = [#tpu.dimension_semantics<parallel>, #tpu.dimension_semantics<parallel>], iteration_bounds = array<i64: 1, 1>, scalar_prefetch = 0 : i64, scratch_operands = 0 : i64, tpu.core_type = #tpu.core_type<tc>, window_params = [{transform_indices = @transform_0, window_bounds = array<i64: 32, 32>}, {transform_indices = @transform_1, window_bounds = array<i64: 32, 32>}, {transform_indices = @transform_2, window_bounds = array<i64: 1, 32>}, {transform_indices = @transform_3, window_bounds = array<i64: 32, 32>}]} {
    %c0 = arith.constant 0 : index
    %c0_0 = arith.constant 0 : index
    %0 = vector.load %arg2[%c0, %c0_0] : memref<32x32xbf16, #tpu.memory_space<vmem>>, vector<32x32xbf16>
    %c0_1 = arith.constant 0 : index
    %c0_2 = arith.constant 0 : index
    %1 = vector.load %arg3[%c0_1, %c0_2] : memref<32x32xbf16, #tpu.memory_space<vmem>>, vector<32x32xbf16>
    %cst = arith.constant dense<0.000000e+00> : vector<32x32xf32>
    %2 = tpu.matmul %0, %1, %cst {dimension_numbers = #tpu.dot_dimension_numbers<[1], [0], [0], [1], [0, 0, 1, 1], [], []>} : vector<32x32xbf16>, vector<32x32xbf16>, vector<32x32xf32> -> vector<32x32xf32>
    %c0_3 = arith.constant 0 : index
    %c0_4 = arith.constant 0 : index
    %3 = vector.load %arg4[%c0_3, %c0_4] : memref<1x32xf32, #tpu.memory_space<vmem>>, vector<1x32xf32>
    %4 = vector.broadcast %3 : vector<1x32xf32> to vector<32x32xf32>
    %5 = arith.addf %2, %4 : vector<32x32xf32>
    %6 = arith.truncf %5 : vector<32x32xf32> to vector<32x32xbf16>
    %c0_5 = arith.constant 0 : index
    %c0_6 = arith.constant 0 : index
    %7 = vector.load %arg5[%c0_5, %c0_6] : memref<32x32xbf16, #tpu.memory_space<vmem>>, vector<32x32xbf16>
    tpu.vector_store %arg5[%c0_5, %c0_6], %6 {strides = array<i32>} : memref<32x32xbf16, #tpu.memory_space<vmem>>, vector<32x32xbf16>,
    return
  }
  func.func @transform_0(%arg0: i32, %arg1: i32) -> (i32, i32) {
    %c0_i32 = arith.constant 0 : i32
    %c0_i32_0 = arith.constant 0 : i32
    return %arg0, %c0_i32 : i32, i32
  }
  func.func @transform_1(%arg0: i32, %arg1: i32) -> (i32, i32) {
    %c0_i32 = arith.constant 0 : i32
    %c0_i32_0 = arith.constant 0 : i32
    return %c0_i32, %arg1 : i32, i32
  }
  func.func @transform_2(%arg0: i32, %arg1: i32) -> (i32, i32) {
    %c0_i32 = arith.constant 0 : i32
    %c0_i32_0 = arith.constant 0 : i32
    return %c0_i32, %arg1 : i32, i32
  }
  func.func @transform_3(%arg0: i32, %arg1: i32) -> (i32, i32) {
    %c0_i32 = arith.constant 0 : i32
    return %arg0, %arg1 : i32, i32
  }
}

</mosaic_0001>

<llo_original>
// kernel: tpu_custom_call.1
$region0: #{tpu_custom_call.1}
  #allocation0 [shape = 'u32[]', space=smem, size = 0x4, offset = 0x4, fixed_abs, tag = 'smem constant byte address 0x4 - core index']
  #allocation1 [shape = 'u32[144,128]{1,0:T(1,128)}', space=vmem, size = 0x12000, scoped, tag = 'internal scratch']
  %s0 = inlined_call_operand.hbm [shape: bf16[32,32], index: 0, kind: input, shape index: {}]
  %s1 = inlined_call_operand.hbm [shape: bf16[32,32], index: 1, kind: input, shape index: {}]
  %s2 = inlined_call_operand.vmem [shape: f32[1,32], index: 2, kind: input, shape index: {}]
  %s3 = inlined_call_operand.hbm [shape: bf16[32,32], index: 3, kind: output, shape index: {}]
  %s4 = sld [smem:[#allocation0]]
  $region30: #{tpu_custom_call.1} parent=0
    _
  %s6 = ssub.s32 1, %s4
  %s7 = scalar_select 0, %s6, %s4
  $region1: #{tpu_custom_call.1} parent=0
    #allocation2 [shape = 'u8[8192]{0}', space=vmem, size = 0x2000, scoped, tag = 'input window, operand 0, single buffered']
    #allocation3 [shape = 's32[1]{0}', space=sflag, size = 0x4, scoped, tag = 'scoped memory for tpu_custom_call.1']
    #allocation4 [shape = 's32[1]{0}', space=sflag, size = 0x4, scoped, tag = 'scoped memory for tpu_custom_call.1']
    #allocation5 [shape = 'u8[8192]{0}', space=vmem, size = 0x2000, scoped, tag = 'input window, operand 1, single buffered']
    #allocation6 [shape = 's32[1]{0}', space=sflag, size = 0x4, scoped, tag = 'scoped memory for tpu_custom_call.1']
    #allocation7 [shape = 'u8[8192]{0}', space=vmem, size = 0x2000, scoped, tag = 'output window, operand 0, single buffered']
    %8 = vsyncpa [#allocation3], 0
    %9 = vsyncpa [#allocation6], 0
    %10 = vsyncpa [#allocation4], 0
    // Predicated region
    $region2: #{tpu_custom_call.1} parent=1 // pred_check
      _
    $region3: #{tpu_custom_call.1} parent=1 // pred_check_branch
      %12 = sbr.rel (0) target = $region5
    $region4: #{tpu_custom_call.1} parent=1 // pred_region
      %s14 = ssub.s32 256, 256
      %15 = vsyncadd [#allocation3], %s14
      %s16 = sshll.u32 [#allocation2], 4
      %s17 = int_to_ptr.vmem [resolvable:$true] %s16
      %22 = dma.hbm_to_vmem [thread:$0]  %s0, 256, %s17, [#allocation3], 64, 64, 4
    $region5: #{tpu_custom_call.1} parent=1 // pred_fallthru
      _
    // Predicated region
    $region6: #{tpu_custom_call.1} parent=1 // pred_check
      _
    $region7: #{tpu_custom_call.1} parent=1 // pred_check_branch
      %24 = sbr.rel (0) target = $region9
    $region8: #{tpu_custom_call.1} parent=1 // pred_region
      %s26 = ssub.s32 256, 256
      %27 = vsyncadd [#allocation6], %s26
      %s28 = sshll.u32 [#allocation5], 4
      %s29 = int_to_ptr.vmem [resolvable:$true] %s28
      %34 = dma.hbm_to_vmem [thread:$0]  %s1, 256, %s29, [#allocation6], 64, 64, 4
    $region9: #{tpu_custom_call.1} parent=1 // pred_fallthru
      _
    // Predicated region
    $region10: #{tpu_custom_call.1} parent=1 // pred_check
      _
    $region11: #{tpu_custom_call.1} parent=1 // pred_check_branch
      %36 = sbr.rel (0) target = $region13
    $region12: #{tpu_custom_call.1} parent=1 // pred_region
      _
    $region13: #{tpu_custom_call.1} parent=1 // pred_fallthru
      _
    // Predicated region
    $region14: #{tpu_custom_call.1} parent=1 // pred_check
      _
    $region15: #{tpu_custom_call.1} parent=1 // pred_check_branch
      %38 = sbr.rel (0) target = $region17
    $region16: #{tpu_custom_call.1} parent=1 // pred_region
      %39 = dma.done [#allocation3], 256
    $region17: #{tpu_custom_call.1} parent=1 // pred_fallthru
      _
    // Predicated region
    $region18: #{tpu_custom_call.1} parent=1 // pred_check
      _
    $region19: #{tpu_custom_call.1} parent=1 // pred_check_branch
      %41 = sbr.rel (0) target = $region21
    $region20: #{tpu_custom_call.1} parent=1 // pred_region
      %42 = dma.done [#allocation6], 256
    $region21: #{tpu_custom_call.1} parent=1 // pred_fallthru
      _
    %v44 = vld [vmem:[#allocation2] sm:$0xf]
    %v45 = vld [vmem:[#allocation2 + $0x4] sm:$0xf]
    %v46 = vld [vmem:[#allocation2 + $0x8] sm:$0xf]
    %v47 = vld [vmem:[#allocation2 + $0xc] sm:$0xf]
    %v48 = vld [vmem:[#allocation5] sm:$0xf]
    %v49 = vld [vmem:[#allocation5 + $0x4] sm:$0xf]
    %v50 = vld [vmem:[#allocation5 + $0x8] sm:$0xf]
    %v51 = vld [vmem:[#allocation5 + $0xc] sm:$0xf]
    %v52 = vld [vmem:[%s2] sm:$0x1]
    %v54 = vlaneseq
    %v55 = vshrl.u32 %v54, 7
    %v56 = vsub.s32 0, %v55
    %v57 = vrot.slane %v52, %v56
    %v63 = vunpack.c.l.b16 %v44
    %v64 = vunpack.c.l.b16 %v45
    %v65 = vunpack.c.l.b16 %v46
    %v66 = vunpack.c.l.b16 %v47
    %v67 = vpack.c.b16 %v64, %v63
    %v68 = vpack.c.b16 %v66, %v65
    %v73 = vunpack.c.l.b16 %v48
    %v74 = vunpack.c.l.b16 %v49
    %v75 = vunpack.c.l.b16 %v50
    %v76 = vunpack.c.l.b16 %v51
    %v77 = vpack.c.b16 %v74, %v73
    %v78 = vpack.c.b16 %v76, %v75
    %vm81 = vcmask 261120
    %v83 = vsel %vm81, %v67, 0
    %v86 = vsel %vm81, %v68, 0
    %88 = vmatprep.subr.bf16.mxu0 0
    %89 = vmatpush1.bf16.msra.mxu0 0
    %90 = vmatprep.subr.bf16.mxu0 0
    %91 = vmatpush1.bf16.msra.mxu0 0
    %92 = vmatprep.subr.bf16.mxu0 0
    %93 = vmatpush1.bf16.msra.mxu0 0
    %94 = vmatprep.subr.bf16.mxu0 0
    %95 = vmatpush1.bf16.msra.mxu0 0
    %96 = vmatprep.subr.bf16.mxu0 0
    %97 = vmatpush1.bf16.msra.mxu0 0
    %98 = vmatprep.subr.bf16.mxu0 0
    %99 = vmatpush1.bf16.msra.mxu0 0
    %100 = vmatprep.subr.bf16.mxu0 0
    %101 = vmatpush1.bf16.msra.mxu0 %v78
    %102 = vmatprep.subr.bf16.mxu0 0
    %103 = vmatpush1.bf16.msra.mxu0 %v77
    %104 = vmatprep.subr.bf16.mxu0 0
    %105 = vmatpush2.bf16.msra.mxu0 0
    %106 = vmatprep.subr.bf16.mxu0 0
    %107 = vmatpush2.bf16.msra.mxu0 0
    %108 = vmatprep.subr.bf16.mxu0 0
    %109 = vmatpush2.bf16.msra.mxu0 0
    %110 = vmatprep.subr.bf16.mxu0 0
    %111 = vmatpush2.bf16.msra.mxu0 0
    %112 = vmatprep.subr.bf16.mxu0 0
    %113 = vmatpush2.bf16.msra.mxu0 0
    %114 = vmatprep.subr.bf16.mxu0 0
    %115 = vmatpush2.bf16.msra.mxu0 0
    %116 = vmatprep.subr.bf16.mxu0 0
    %117 = vmatpush2.bf16.msra.mxu0 0
    %118 = vmatprep.subr.bf16.mxu0 0
    %119 = vmatpush2.bf16.msra.mxu0 0
    %120 = vmatprep.mubr.bf16.mxu0 0
    %121 = vmatmul.mubr.bf16.gmra.mxu0 %v83
    %v122 = vpop.f32.mrf.mxu0
    %v123 = vadd.f32 %v57, %v122
    %v124 = vpop.f32.mrf.mxu0
    %v125 = vpop.f32.mrf.mxu0
    %v126 = vadd.f32 %v57, %v125
    %v127 = vpop.f32.mrf.mxu0
    %128 = vmatprep.mubr.bf16.mxu0 0
    %129 = vmatmul.mubr.bf16.gmra.mxu0 %v86
    %v130 = vpop.f32.mrf.mxu0
    %v131 = vadd.f32 %v57, %v130
    %v132 = vpop.f32.mrf.mxu0
    %v133 = vpop.f32.mrf.mxu0
    %v134 = vadd.f32 %v57, %v133
    %v135 = vpop.f32.mrf.mxu0
    %136 = vdwg.mxu0
    %v137 = vpack.c.bf16 %v126, %v123
    %v138 = vpack.c.bf16 %v134, %v131
    %v141 = vunpack.c.l.b16 %v137
    %v142 = vunpack.c.h.b16 %v137
    %v143 = vunpack.c.l.b16 %v138
    %v144 = vunpack.c.h.b16 %v138
    %v145 = vpack.c.b16 %v141, %v141
    %v146 = vpack.c.b16 %v142, %v142
    %v147 = vpack.c.b16 %v143, %v143
    %v148 = vpack.c.b16 %v144, %v144
    %vm153 = vcmask 257024
    %154 = vst.msk [vmem:[#allocation7] sm:$0xf] %vm153, %v145
    %155 = vst.msk [vmem:[#allocation7 + $0x4] sm:$0xf] %vm153, %v146
    %156 = vst.msk [vmem:[#allocation7 + $0x8] sm:$0xf] %vm153, %v147
    %157 = vst.msk [vmem:[#allocation7 + $0xc] sm:$0xf] %vm153, %v148
    // Predicated region
    $region22: #{tpu_custom_call.1} parent=1 // pred_check
      _
    $region23: #{tpu_custom_call.1} parent=1 // pred_check_branch
      %159 = sbr.rel (0) target = $region25
    $region24: #{tpu_custom_call.1} parent=1 // pred_region
      %s161 = ssub.s32 256, 256
      %162 = vsyncadd [#allocation4], %s161
      %s163 = sshll.u32 [#allocation7], 4
      %s164 = int_to_ptr.vmem [resolvable:$true] %s163
      %169 = dma.vmem_to_hbm [thread:$0]  %s164, 256, %s3, [#allocation4], 64, 64, 4
    $region25: #{tpu_custom_call.1} parent=1 // pred_fallthru
      _
    // Predicated region
    $region26: #{tpu_custom_call.1} parent=1 // pred_check
      _
    $region27: #{tpu_custom_call.1} parent=1 // pred_check_branch
      %171 = sbr.rel (0) target = $region29
    $region28: #{tpu_custom_call.1} parent=1 // pred_region
      %172 = dma.done [#allocation4], 256
    $region29: #{tpu_custom_call.1} parent=1 // pred_fallthru
      _
    %173 = vsyncpa [#allocation3], 1
    %174 = vsyncpa [#allocation6], 1
    %175 = vsyncpa [#allocation4], 1

</llo_original>
